<compile_context>
chip_gen: v7x
topology: tpu7x:2x2x1
jax: 0.10.0
libtpu: 0.0.40
codegen_flags: <defaults>
</compile_context>

<pallas_src>
import functools

import jax
import jax.numpy as jnp
from jax.experimental import pallas as pl
from jax.experimental.pallas import tpu as pltpu

BN_EPS = 1e-5   # torch.nn.BatchNorm1d default eps
LANE = 128      # TPU lane width; all feature dims are zero-padded to this
N_VEC = 8       # rows of per-feature vectors appended to the parameter slab
SLAB_ROWS = 3 * LANE + N_VEC   # 392


def _bn_relu_folded(h, gamma, beta):
    # Training-mode BatchNorm1d (batch mean, biased batch variance) with the
    # affine folded into one scale/shift, then ReLU. rsqrt lowers to the EUP.
    mean = jnp.mean(h, axis=0, keepdims=True)
    var = jnp.mean((h - mean) ** 2, axis=0, keepdims=True)
    scale = gamma * jax.lax.rsqrt(var + BN_EPS)
    shift = beta - mean * scale
    return jnp.maximum(h * scale + shift, 0.0)


def generator_kernel(a_ref, p_ref, out_ref):
    # a_ref : (3, B, 128)  [0] = [z_mu | c | 0], [1] = [z_logvar | 0], [2] = [eps | 0]
    # p_ref : (392, 128)   rows   0:128 -> W1 (zero-padded, rows 0:latent+con used)
    #                      rows 128:256 -> W2
    #                      rows 256:384 -> W3
    #                      rows 384:392 -> g1, be1, g2, be2, b3, 0, 0, 0
    # All slice offsets are multiples of 8 -> tile-aligned static slices.
    w1 = p_ref[0:LANE, :]
    w2 = p_ref[LANE:2 * LANE, :]
    w3 = p_ref[2 * LANE:3 * LANE, :]
    vp = p_ref[3 * LANE:3 * LANE + N_VEC, :]
    g1, be1 = vp[0:1, :], vp[1:2, :]
    g2, be2 = vp[2:3, :], vp[3:4, :]
    b3 = vp[4:5, :]

    # sample_z fused with the (z, c) feature concat: padded lanes of logvar/eps
    # are zero, so exp(0)*0 = 0 keeps c and the zero padding intact.
    x = a_ref[0] + jnp.exp(a_ref[1] * 0.5) * a_ref[2]

    # Layer 1: Linear (bias dropped — cancelled by training-mode BN) + BN + ReLU.
    h = jnp.dot(x, w1, preferred_element_type=jnp.float32)
    h = _bn_relu_folded(h, g1, be1)

    # Layer 2: Linear (bias dropped) + BN + ReLU.
    h = jnp.dot(h, w2, preferred_element_type=jnp.float32)
    h = _bn_relu_folded(h, g2, be2)

    # Final layer: Linear only (BN/ReLU stripped in __init__). Lane-dense store.
    out_ref[...] = jnp.dot(h, w3, preferred_element_type=jnp.float32) + b3


# ---------------------------------------------------------------------------
# One-time (model init) parameter packing. NOT on the per-call path.
# ---------------------------------------------------------------------------
def pack_params(params):
    def pad_w(w):
        w = jnp.asarray(w, jnp.float32)
        assert w.shape[0] <= LANE and w.shape[1] <= LANE, "feature dims must be <= 128"
        # Zero padding everywhere — required by the padded-lane invariant above.
        return jnp.pad(w, ((0, LANE - w.shape[0]), (0, LANE - w.shape[1])))

    def pad_v(v):
        v = jnp.asarray(v, jnp.float32).reshape(-1)
        assert v.shape[0] <= LANE
        return jnp.pad(v, (0, LANE - v.shape[0]))   # zero padding (never ones)

    vec = jnp.stack([
        pad_v(params["g1"]), pad_v(params["be1"]),
        pad_v(params["g2"]), pad_v(params["be2"]),
        pad_v(params["b3"]),
        jnp.zeros((LANE,), jnp.float32),
        jnp.zeros((LANE,), jnp.float32),
        jnp.zeros((LANE,), jnp.float32),
    ], axis=0)                                       # (8, 128)

    slab = jnp.concatenate(
        [pad_w(params["w1"]), pad_w(params["w2"]), pad_w(params["w3"]), vec],
        axis=0)                                      # (392, 128)
    assert slab.shape == (SLAB_ROWS, LANE)
    return slab


# ---------------------------------------------------------------------------
# Per-call activation packing: pad + concat + stack -> a single XLA fusion.
# ---------------------------------------------------------------------------
def pack_activations(z_mu, z_logvar, c, eps):
    B, latent = z_mu.shape
    con = c.shape[1]
    row0 = jnp.pad(jnp.concatenate([z_mu, c], axis=1).astype(jnp.float32),
                   ((0, 0), (0, LANE - latent - con)))
    row1 = jnp.pad(z_logvar.astype(jnp.float32), ((0, 0), (0, LANE - latent)))
    row2 = jnp.pad(eps.astype(jnp.float32), ((0, 0), (0, LANE - latent)))
    return jnp.stack([row0, row1, row2], axis=0)     # (3, B, 128)


@functools.partial(jax.jit, static_argnames=("out_dim",))
def generator_forward(z_mu, z_logvar, c, eps, param_slab, out_dim):
    B = z_mu.shape[0]
    a = pack_activations(z_mu, z_logvar, c, eps)

    cost = pl.CostEstimate(
        flops=2 * 3 * B * LANE * LANE,
        transcendentals=2 * B * LANE,
        bytes_accessed=(a.size + param_slab.size + B * LANE) * 4,
    )

    vmem = pl.BlockSpec(memory_space=pltpu.MemorySpace.VMEM)
    out = pl.pallas_call(
        generator_kernel,
        out_shape=jax.ShapeDtypeStruct((B, LANE), jnp.float32),
        in_specs=[vmem, vmem],
        out_specs=vmem,
        cost_estimate=cost,
    )(a, param_slab)
    # Slice fuses into this jit; consumers that can take the lane-dense (B,128)
    # slab directly should skip it.
    return out[:, :out_dim]


# ---------------------------------------------------------------------------
# Pure-JAX reference, faithful to the PyTorch module (includes b1/b2).
# ---------------------------------------------------------------------------
def generator_reference(z_mu, z_logvar, c, eps, params):
    def bn_relu(h, g, b):
        mean = jnp.mean(h, axis=0, keepdims=True)
        var = jnp.mean((h - mean) ** 2, axis=0, keepdims=True)
        return jnp.maximum((h - mean) / jnp.sqrt(var + BN_EPS) * g + b, 0.0)

    z = z_mu + jnp.exp(z_logvar * 0.5) * eps
    x = jnp.concatenate([z, c], axis=1)
    h = x @ params["w1"] + params["b1"]
    h = bn_relu(h, params["g1"], params["be1"])
    h = h @ params["w2"] + params["b2"]
    h = bn_relu(h, params["g2"], params["be2"])
    return h @ params["w3"] + params["b3"]


def make_params(key, dims, latent_dim, con_dim):
    # dims is the original-order list; Generator.__init__ reverses it.
    rdims = list(reversed(dims))                     # e.g. [64, 32, 16]
    in_dim = latent_dim + con_dim
    ks = jax.random.split(key, 12)

    def init_w(k, fan_in, fan_out):
        return (jax.random.normal(k, (fan_in, fan_out), jnp.float32)
                / jnp.sqrt(jnp.float32(fan_in)))

    return {
        "w1": init_w(ks[0], in_dim, rdims[0]),
        "b1": 0.01 * jax.random.normal(ks[1], (1, rdims[0]), jnp.float32),
        "g1": 1.0 + 0.1 * jax.random.normal(ks[2], (1, rdims[0]), jnp.float32),
        "be1": 0.1 * jax.random.normal(ks[3], (1, rdims[0]), jnp.float32),
        "w2": init_w(ks[4], rdims[0], rdims[1]),
        "b2": 0.01 * jax.random.normal(ks[5], (1, rdims[1]), jnp.float32),
        "g2": 1.0 + 0.1 * jax.random.normal(ks[6], (1, rdims[1]), jnp.float32),
        "be2": 0.1 * jax.random.normal(ks[7], (1, rdims[1]), jnp.float32),
        "w3": init_w(ks[8], rdims[1], rdims[2]),
        "b3": 0.01 * jax.random.normal(ks[9], (1, rdims[2]), jnp.float32),
    }


if __name__ == "__main__":
    # Module config: Generator(dims=[16, 32, 64], latent_dim=8, con_dim=4)
    dims = [16, 32, 64]
    latent_dim, con_dim = 8, 4
    batch = 8

    key = jax.random.PRNGKey(0)
    kp, kmu, kvar, kc, keps = jax.random.split(key, 5)

    params = make_params(kp, dims, latent_dim, con_dim)
    out_dim = params["w3"].shape[1]                  # dims reversed -> final width = 16

    # One-time packing at model init (static across forward calls).
    param_slab = jax.block_until_ready(pack_params(params))

    z_mu = jax.random.normal(kmu, (batch, latent_dim), jnp.float32)
    z_logvar = 0.1 * jax.random.normal(kvar, (batch, latent_dim), jnp.float32)
    c = jax.random.normal(kc, (batch, con_dim), jnp.float32)
    # eps replaces the in-module torch.randn(...).cuda() for determinism.
    eps = jax.random.normal(keps, (batch, latent_dim), jnp.float32)

    out = generator_forward(z_mu, z_logvar, c, eps, param_slab, out_dim)
    out = jax.block_until_ready(out)

    ref = generator_reference(z_mu, z_logvar, c, eps, params)
    assert out.shape == (batch, dims[0])             # dims reversed -> final width = 16
    assert jnp.allclose(out, ref, atol=1e-4, rtol=1e-4), "mismatch vs reference"

    print("KERNEL_OK")
</pallas_src>

<mosaic_0001>
module attributes {stable_mosaic.version = 11 : i64} {
  func.func @generator_kernel(%arg0: memref<3x8x128xf32, #tpu.memory_space<vmem>>, %arg1: memref<392x128xf32, #tpu.memory_space<vmem>>, %arg2: memref<8x128xf32, #tpu.memory_space<vmem>>) attributes {dimension_semantics = [], scalar_prefetch = 0 : i64, scratch_operands = 0 : i64, tpu.core_type = #tpu.core_type<tc>} {
    %c0 = arith.constant 0 : index
    %c0_0 = arith.constant 0 : index
    %0 = vector.load %arg1[%c0, %c0_0] : memref<392x128xf32, #tpu.memory_space<vmem>>, vector<128x128xf32>
    %c128 = arith.constant 128 : index
    %c0_1 = arith.constant 0 : index
    %1 = vector.load %arg1[%c128, %c0_1] : memref<392x128xf32, #tpu.memory_space<vmem>>, vector<128x128xf32>
    %c256 = arith.constant 256 : index
    %c0_2 = arith.constant 0 : index
    %2 = vector.load %arg1[%c256, %c0_2] : memref<392x128xf32, #tpu.memory_space<vmem>>, vector<128x128xf32>
    %c384 = arith.constant 384 : index
    %c0_3 = arith.constant 0 : index
    %3 = vector.load %arg1[%c384, %c0_3] : memref<392x128xf32, #tpu.memory_space<vmem>>, vector<8x128xf32>
    %4 = vector.extract_strided_slice %3 {offsets = [0, 0], sizes = [1, 128], strides = [1, 1]} : vector<8x128xf32> to vector<1x128xf32>
    %5 = vector.extract_strided_slice %3 {offsets = [1, 0], sizes = [1, 128], strides = [1, 1]} : vector<8x128xf32> to vector<1x128xf32>
    %6 = vector.extract_strided_slice %3 {offsets = [2, 0], sizes = [1, 128], strides = [1, 1]} : vector<8x128xf32> to vector<1x128xf32>
    %7 = vector.extract_strided_slice %3 {offsets = [3, 0], sizes = [1, 128], strides = [1, 1]} : vector<8x128xf32> to vector<1x128xf32>
    %8 = vector.extract_strided_slice %3 {offsets = [4, 0], sizes = [1, 128], strides = [1, 1]} : vector<8x128xf32> to vector<1x128xf32>
    %c0_4 = arith.constant 0 : index
    %c0_5 = arith.constant 0 : index
    %c0_6 = arith.constant 0 : index
    %9 = vector.load %arg0[%c0_4, %c0_5, %c0_6] : memref<3x8x128xf32, #tpu.memory_space<vmem>>, vector<1x8x128xf32>
    %10 = vector.shape_cast %9 : vector<1x8x128xf32> to vector<8x128xf32>
    %c1 = arith.constant 1 : index
    %c0_7 = arith.constant 0 : index
    %c0_8 = arith.constant 0 : index
    %11 = vector.load %arg0[%c1, %c0_7, %c0_8] : memref<3x8x128xf32, #tpu.memory_space<vmem>>, vector<1x8x128xf32>
    %12 = vector.shape_cast %11 : vector<1x8x128xf32> to vector<8x128xf32>
    %cst = arith.constant 5.000000e-01 : f32
    %13 = vector.broadcast %cst : f32 to vector<8x128xf32>
    %14 = arith.mulf %12, %13 : vector<8x128xf32>
    %15 = math.exp %14 : vector<8x128xf32>
    %c2 = arith.constant 2 : index
    %c0_9 = arith.constant 0 : index
    %c0_10 = arith.constant 0 : index
    %16 = vector.load %arg0[%c2, %c0_9, %c0_10] : memref<3x8x128xf32, #tpu.memory_space<vmem>>, vector<1x8x128xf32>
    %17 = vector.shape_cast %16 : vector<1x8x128xf32> to vector<8x128xf32>
    %18 = arith.mulf %15, %17 : vector<8x128xf32>
    %19 = arith.addf %10, %18 : vector<8x128xf32>
    %cst_11 = arith.constant dense<0.000000e+00> : vector<8x128xf32>
    %20 = tpu.matmul %19, %0, %cst_11 {dimension_numbers = #tpu.dot_dimension_numbers<[1], [0], [0], [1], [0, 0, 1, 1], [], []>} : vector<8x128xf32>, vector<128x128xf32>, vector<8x128xf32> -> vector<8x128xf32>
    %cst_12 = arith.constant dense<0.000000e+00> : vector<128xf32>
    %21 = vector.multi_reduction <add>, %20, %cst_12 [0] : vector<8x128xf32> to vector<128xf32>
    %22 = vector.shape_cast %21 : vector<128xf32> to vector<1x128xf32>
    %cst_13 = arith.constant 8.000000e+00 : f32
    %23 = vector.broadcast %cst_13 : f32 to vector<1x128xf32>
    %24 = arith.divf %22, %23 : vector<1x128xf32>
    %25 = vector.broadcast %24 : vector<1x128xf32> to vector<8x128xf32>
    %26 = arith.subf %20, %25 : vector<8x128xf32>
    %27 = arith.mulf %26, %26 : vector<8x128xf32>
    %cst_14 = arith.constant dense<0.000000e+00> : vector<128xf32>
    %28 = vector.multi_reduction <add>, %27, %cst_14 [0] : vector<8x128xf32> to vector<128xf32>
    %29 = vector.shape_cast %28 : vector<128xf32> to vector<1x128xf32>
    %cst_15 = arith.constant 8.000000e+00 : f32
    %30 = vector.broadcast %cst_15 : f32 to vector<1x128xf32>
    %31 = arith.divf %29, %30 : vector<1x128xf32>
    %cst_16 = arith.constant 9.99999974E-6 : f32
    %32 = vector.broadcast %cst_16 : f32 to vector<1x128xf32>
    %33 = arith.addf %31, %32 : vector<1x128xf32>
    %34 = math.rsqrt %33 : vector<1x128xf32>
    %35 = arith.mulf %4, %34 : vector<1x128xf32>
    %36 = arith.mulf %24, %35 : vector<1x128xf32>
    %37 = arith.subf %5, %36 : vector<1x128xf32>
    %38 = vector.broadcast %35 : vector<1x128xf32> to vector<8x128xf32>
    %39 = arith.mulf %20, %38 : vector<8x128xf32>
    %40 = vector.broadcast %37 : vector<1x128xf32> to vector<8x128xf32>
    %41 = arith.addf %39, %40 : vector<8x128xf32>
    %cst_17 = arith.constant 0.000000e+00 : f32
    %42 = vector.broadcast %cst_17 : f32 to vector<8x128xf32>
    %43 = arith.maximumf %41, %42 : vector<8x128xf32>
    %cst_18 = arith.constant dense<0.000000e+00> : vector<8x128xf32>
    %44 = tpu.matmul %43, %1, %cst_18 {dimension_numbers = #tpu.dot_dimension_numbers<[1], [0], [0], [1], [0, 0, 1, 1], [], []>} : vector<8x128xf32>, vector<128x128xf32>, vector<8x128xf32> -> vector<8x128xf32>
    %cst_19 = arith.constant dense<0.000000e+00> : vector<128xf32>
    %45 = vector.multi_reduction <add>, %44, %cst_19 [0] : vector<8x128xf32> to vector<128xf32>
    %46 = vector.shape_cast %45 : vector<128xf32> to vector<1x128xf32>
    %cst_20 = arith.constant 8.000000e+00 : f32
    %47 = vector.broadcast %cst_20 : f32 to vector<1x128xf32>
    %48 = arith.divf %46, %47 : vector<1x128xf32>
    %49 = vector.broadcast %48 : vector<1x128xf32> to vector<8x128xf32>
    %50 = arith.subf %44, %49 : vector<8x128xf32>
    %51 = arith.mulf %50, %50 : vector<8x128xf32>
    %cst_21 = arith.constant dense<0.000000e+00> : vector<128xf32>
    %52 = vector.multi_reduction <add>, %51, %cst_21 [0] : vector<8x128xf32> to vector<128xf32>
    %53 = vector.shape_cast %52 : vector<128xf32> to vector<1x128xf32>
    %cst_22 = arith.constant 8.000000e+00 : f32
    %54 = vector.broadcast %cst_22 : f32 to vector<1x128xf32>
    %55 = arith.divf %53, %54 : vector<1x128xf32>
    %cst_23 = arith.constant 9.99999974E-6 : f32
    %56 = vector.broadcast %cst_23 : f32 to vector<1x128xf32>
    %57 = arith.addf %55, %56 : vector<1x128xf32>
    %58 = math.rsqrt %57 : vector<1x128xf32>
    %59 = arith.mulf %6, %58 : vector<1x128xf32>
    %60 = arith.mulf %48, %59 : vector<1x128xf32>
    %61 = arith.subf %7, %60 : vector<1x128xf32>
    %62 = vector.broadcast %59 : vector<1x128xf32> to vector<8x128xf32>
    %63 = arith.mulf %44, %62 : vector<8x128xf32>
    %64 = vector.broadcast %61 : vector<1x128xf32> to vector<8x128xf32>
    %65 = arith.addf %63, %64 : vector<8x128xf32>
    %cst_24 = arith.constant 0.000000e+00 : f32
    %66 = vector.broadcast %cst_24 : f32 to vector<8x128xf32>
    %67 = arith.maximumf %65, %66 : vector<8x128xf32>
    %cst_25 = arith.constant dense<0.000000e+00> : vector<8x128xf32>
    %68 = tpu.matmul %67, %2, %cst_25 {dimension_numbers = #tpu.dot_dimension_numbers<[1], [0], [0], [1], [0, 0, 1, 1], [], []>} : vector<8x128xf32>, vector<128x128xf32>, vector<8x128xf32> -> vector<8x128xf32>
    %69 = vector.broadcast %8 : vector<1x128xf32> to vector<8x128xf32>
    %70 = arith.addf %68, %69 : vector<8x128xf32>
    %c0_26 = arith.constant 0 : index
    %c0_27 = arith.constant 0 : index
    %71 = vector.load %arg2[%c0_26, %c0_27] : memref<8x128xf32, #tpu.memory_space<vmem>>, vector<8x128xf32>
    tpu.vector_store %arg2[%c0_26, %c0_27], %70 {strides = array<i32>} : memref<8x128xf32, #tpu.memory_space<vmem>>, vector<8x128xf32>,
    return
  }
}

</mosaic_0001>

<llo_original>
// kernel: generator_forward.1
$region0: #{generator_forward.1}
  #allocation0 [shape = 'u32[]', space=smem, size = 0x4, offset = 0x4, fixed_abs, tag = 'smem constant byte address 0x4 - core index']
  #allocation1 [shape = 'u32[144,128]{1,0:T(1,128)}', space=vmem, size = 0x12000, scoped, tag = 'internal scratch']
  %s0 = inlined_call_operand.vmem [shape: f32[3,8,128], index: 0, kind: input, shape index: {}]
  %s1 = inlined_call_operand.hbm [shape: f32[392,128], index: 1, kind: input, shape index: {}]
  %s2 = inlined_call_operand.hbm [shape: f32[8,128], index: 2, kind: output, shape index: {}]
  %s3 = sld [smem:[#allocation0]]
  $region22: #{generator_forward.1} parent=0
    _
  %s5 = ssub.s32 1, %s3
  %s6 = scalar_select 0, %s5, %s3
  $region1: #{generator_forward.1} parent=0
    #allocation2 [shape = 'u8[200704]{0}', space=vmem, size = 0x31000, scoped, tag = 'input window, operand 1, single buffered']
    #allocation3 [shape = 's32[1]{0}', space=sflag, size = 0x4, scoped, tag = 'scoped memory for generator_forward.1']
    #allocation4 [shape = 's32[1]{0}', space=sflag, size = 0x4, scoped, tag = 'scoped memory for generator_forward.1']
    #allocation5 [shape = 'u8[4096]{0}', space=vmem, size = 0x1000, scoped, tag = 'output window, operand 0, single buffered']
    %7 = vsyncpa [#allocation3], 0
    %8 = vsyncpa [#allocation4], 0
    // Predicated region
    $region2: #{generator_forward.1} parent=1 // pred_check
      _
    $region3: #{generator_forward.1} parent=1 // pred_check_branch
      %10 = sbr.rel (0) target = $region5
    $region4: #{generator_forward.1} parent=1 // pred_region
      _
    $region5: #{generator_forward.1} parent=1 // pred_fallthru
      _
    // Predicated region
    $region6: #{generator_forward.1} parent=1 // pred_check
      _
    $region7: #{generator_forward.1} parent=1 // pred_check_branch
      %12 = sbr.rel (0) target = $region9
    $region8: #{generator_forward.1} parent=1 // pred_region
      %s14 = ssub.s32 6272, 6272
      %15 = vsyncadd [#allocation3], %s14
      %s16 = sshll.u32 [#allocation2], 4
      %s17 = int_to_ptr.vmem [resolvable:$true] %s16
      %22 = dma.hbm_to_vmem [thread:$0]  %s1, 6272, %s17, [#allocation3], 128, 128, 8
    $region9: #{generator_forward.1} parent=1 // pred_fallthru
      _
    // Predicated region
    $region10: #{generator_forward.1} parent=1 // pred_check
      _
    $region11: #{generator_forward.1} parent=1 // pred_check_branch
      %24 = sbr.rel (0) target = $region13
    $region12: #{generator_forward.1} parent=1 // pred_region
      %25 = dma.done [#allocation3], 6272
    $region13: #{generator_forward.1} parent=1 // pred_fallthru
      _
    %v26 = vld [vmem:[#allocation2] sm:$0xff]
    %v27 = vld [vmem:[#allocation2 + $0x8] sm:$0xff]
    %v28 = vld [vmem:[#allocation2 + $0x10] sm:$0xff]
    %v29 = vld [vmem:[#allocation2 + $0x18] sm:$0xff]
    %v30 = vld [vmem:[#allocation2 + $0x20] sm:$0xff]
    %v31 = vld [vmem:[#allocation2 + $0x28] sm:$0xff]
    %v32 = vld [vmem:[#allocation2 + $0x30] sm:$0xff]
    %v33 = vld [vmem:[#allocation2 + $0x38] sm:$0xff]
    %v34 = vld [vmem:[#allocation2 + $0x40] sm:$0xff]
    %v35 = vld [vmem:[#allocation2 + $0x48] sm:$0xff]
    %v36 = vld [vmem:[#allocation2 + $0x50] sm:$0xff]
    %v37 = vld [vmem:[#allocation2 + $0x58] sm:$0xff]
    %v38 = vld [vmem:[#allocation2 + $0x60] sm:$0xff]
    %v39 = vld [vmem:[#allocation2 + $0x68] sm:$0xff]
    %v40 = vld [vmem:[#allocation2 + $0x70] sm:$0xff]
    %v41 = vld [vmem:[#allocation2 + $0x78] sm:$0xff]
    %v42 = vld [vmem:[#allocation2 + $0x80] sm:$0xff]
    %v43 = vld [vmem:[#allocation2 + $0x88] sm:$0xff]
    %v44 = vld [vmem:[#allocation2 + $0x90] sm:$0xff]
    %v45 = vld [vmem:[#allocation2 + $0x98] sm:$0xff]
    %v46 = vld [vmem:[#allocation2 + $0xa0] sm:$0xff]
    %v47 = vld [vmem:[#allocation2 + $0xa8] sm:$0xff]
    %v48 = vld [vmem:[#allocation2 + $0xb0] sm:$0xff]
    %v49 = vld [vmem:[#allocation2 + $0xb8] sm:$0xff]
    %v50 = vld [vmem:[#allocation2 + $0xc0] sm:$0xff]
    %v51 = vld [vmem:[#allocation2 + $0xc8] sm:$0xff]
    %v52 = vld [vmem:[#allocation2 + $0xd0] sm:$0xff]
    %v53 = vld [vmem:[#allocation2 + $0xd8] sm:$0xff]
    %v54 = vld [vmem:[#allocation2 + $0xe0] sm:$0xff]
    %v55 = vld [vmem:[#allocation2 + $0xe8] sm:$0xff]
    %v56 = vld [vmem:[#allocation2 + $0xf0] sm:$0xff]
    %v57 = vld [vmem:[#allocation2 + $0xf8] sm:$0xff]
    %v58 = vld [vmem:[#allocation2 + $0x100] sm:$0xff]
    %v59 = vld [vmem:[#allocation2 + $0x108] sm:$0xff]
    %v60 = vld [vmem:[#allocation2 + $0x110] sm:$0xff]
    %v61 = vld [vmem:[#allocation2 + $0x118] sm:$0xff]
    %v62 = vld [vmem:[#allocation2 + $0x120] sm:$0xff]
    %v63 = vld [vmem:[#allocation2 + $0x128] sm:$0xff]
    %v64 = vld [vmem:[#allocation2 + $0x130] sm:$0xff]
    %v65 = vld [vmem:[#allocation2 + $0x138] sm:$0xff]
    %v66 = vld [vmem:[#allocation2 + $0x140] sm:$0xff]
    %v67 = vld [vmem:[#allocation2 + $0x148] sm:$0xff]
    %v68 = vld [vmem:[#allocation2 + $0x150] sm:$0xff]
    %v69 = vld [vmem:[#allocation2 + $0x158] sm:$0xff]
    %v70 = vld [vmem:[#allocation2 + $0x160] sm:$0xff]
    %v71 = vld [vmem:[#allocation2 + $0x168] sm:$0xff]
    %v72 = vld [vmem:[#allocation2 + $0x170] sm:$0xff]
    %v73 = vld [vmem:[#allocation2 + $0x178] sm:$0xff]
    %v74 = vld [vmem:[#allocation2 + $0x180] sm:$0xff]
    %v75 = vld [vmem:[%s0] sm:$0xff]
    %s76 = scalar_lea.vmem %s0, 8
    %v77 = vld [vmem:[%s76] sm:$0xff]
    %v78 = vmul.f32 %v77, 0.5
    %v79 = vmul.f32 %v78, 1.442695
    %v80 = vpow.pop %v79
    %s81 = scalar_lea.vmem %s0, 16
    %v82 = vld [vmem:[%s81] sm:$0xff]
    %v83 = vmul.f32 %v80, %v82
    %v84 = vadd.f32 %v75, %v83
    %85 = vmatprep.subr.mxu0 0.0
    %86 = vmatpush1.msra.mxu0 %v26
    %87 = vmatprep.subr.mxu0 0.0
    %88 = vmatpush1.msra.mxu0 %v27
    %89 = vmatprep.subr.mxu0 0.0
    %90 = vmatpush1.msra.mxu0 %v28
    %91 = vmatprep.subr.mxu0 0.0
    %92 = vmatpush1.msra.mxu0 %v29
    %93 = vmatprep.subr.mxu0 0.0
    %94 = vmatpush1.msra.mxu0 %v30
    %95 = vmatprep.subr.mxu0 0.0
    %96 = vmatpush1.msra.mxu0 %v31
    %97 = vmatprep.subr.mxu0 0.0
    %98 = vmatpush1.msra.mxu0 %v32
    %99 = vmatprep.subr.mxu0 0.0
    %100 = vmatpush1.msra.mxu0 %v33
    %101 = vmatprep.subr.mxu0 0.0
    %102 = vmatpush1.msra.mxu0 %v34
    %103 = vmatprep.subr.mxu0 0.0
    %104 = vmatpush1.msra.mxu0 %v35
    %105 = vmatprep.subr.mxu0 0.0
    %106 = vmatpush1.msra.mxu0 %v36
    %107 = vmatprep.subr.mxu0 0.0
    %108 = vmatpush1.msra.mxu0 %v37
    %109 = vmatprep.subr.mxu0 0.0
    %110 = vmatpush1.msra.mxu0 %v38
    %111 = vmatprep.subr.mxu0 0.0
    %112 = vmatpush1.msra.mxu0 %v39
    %113 = vmatprep.subr.mxu0 0.0
    %114 = vmatpush1.msra.mxu0 %v40
    %115 = vmatprep.subr.mxu0 0.0
    %116 = vmatpush1.msra.mxu0 %v41
    %117 = vmatprep.subr.mxu0 0.0
    %118 = vmatpush1.msra.mxu0 0.0
    %119 = vmatprep.subr.mxu0 0.0
    %120 = vmatpush1.msra.mxu0 0.0
    %121 = vmatprep.subr.mxu0 0.0
    %122 = vmatpush1.msra.mxu0 0.0
    %123 = vmatprep.subr.mxu0 0.0
    %124 = vmatpush1.msra.mxu0 0.0
    %125 = vmatprep.subr.mxu0 0.0
    %126 = vmatpush1.msra.mxu0 0.0
    %127 = vmatprep.subr.mxu0 0.0
    %128 = vmatpush1.msra.mxu0 0.0
    %129 = vmatprep.subr.mxu0 0.0
    %130 = vmatpush1.msra.mxu0 0.0
    %131 = vmatprep.subr.mxu0 0.0
    %132 = vmatpush1.msra.mxu0 0.0
    %133 = vmatprep.subr.mxu0 0.0
    %134 = vmatpush1.msra.mxu0 0.0
    %135 = vmatprep.subr.mxu0 0.0
    %136 = vmatpush1.msra.mxu0 0.0
    %137 = vmatprep.subr.mxu0 0.0
    %138 = vmatpush1.msra.mxu0 0.0
    %139 = vmatprep.subr.mxu0 0.0
    %140 = vmatpush1.msra.mxu0 0.0
    %141 = vmatprep.subr.mxu0 0.0
    %142 = vmatpush1.msra.mxu0 0.0
    %143 = vmatprep.subr.mxu0 0.0
    %144 = vmatpush1.msra.mxu0 0.0
    %145 = vmatprep.subr.mxu0 0.0
    %146 = vmatpush1.msra.mxu0 0.0
    %147 = vmatprep.subr.mxu0 0.0
    %148 = vmatpush1.msra.mxu0 0.0
    %149 = vmatprep.mubr.f32.mxu0 0.0
    %150 = vmatmul.mubr.f32.gmra.mrb[0].mxu0 %v84
    %v151 = vpop.f32.mrb[0].mxu0
    %v152 = vadd.f32 0.0, %v151
    %v153 = vpop.f32.mrb[0].mxu0
    %154 = vdwg.mxu0
    %v155 = vrot.slane %v152, 4
    %v156 = vadd.f32 %v152, %v155
    %v157 = vrot.slane %v156, 2
    %v158 = vadd.f32 %v156, %v157
    %v159 = vrot.slane %v158, 1
    %v160 = vadd.f32 %v158, %v159
    %v161 = vrcp.pop 8.0
    %v162 = vmul.f32 %v160, %v161
    %v163 = vsub.f32 %v152, %v162
    %v164 = vmul.f32 %v163, %v163
    %v165 = vrot.slane %v164, 4
    %v166 = vadd.f32 %v164, %v165
    %v167 = vrot.slane %v166, 2
    %v168 = vadd.f32 %v166, %v167
    %v169 = vrot.slane %v168, 1
    %v170 = vadd.f32 %v168, %v169
    %v171 = vmul.f32 %v170, %v161
    %v172 = vadd.f32 %v171, 1e-05
    %v173 = vrsqrt.pop %v172
    %v174 = vmul.f32 %v74, %v173
    %v175 = vmul.f32 %v162, %v174
    %v177 = vrot.slane %v175, 7
    %v179 = vsub.f32 %v74, %v177
    %v180 = vlaneseq
    %v181 = vshrl.u32 %v180, 7
    %v182 = vsub.s32 0, %v181
    %v183 = vrot.slane %v174, %v182
    %v184 = vmul.f32 %v152, %v183
    %v185 = vlaneseq
    %v186 = vshrl.u32 %v185, 7
    %v187 = vsub.s32 1, %v186
    %v188 = vrot.slane %v179, %v187
    %v189 = vadd.f32 %v184, %v188
    %v190 = vmax.f32 %v189, 0.0
    %191 = vmatprep.subr.mxu0 0.0
    %192 = vmatpush1.msra.mxu0 %v42
    %193 = vmatprep.subr.mxu0 0.0
    %194 = vmatpush1.msra.mxu0 %v43
    %195 = vmatprep.subr.mxu0 0.0
    %196 = vmatpush1.msra.mxu0 %v44
    %197 = vmatprep.subr.mxu0 0.0
    %198 = vmatpush1.msra.mxu0 %v45
    %199 = vmatprep.subr.mxu0 0.0
    %200 = vmatpush1.msra.mxu0 %v46
    %201 = vmatprep.subr.mxu0 0.0
    %202 = vmatpush1.msra.mxu0 %v47
    %203 = vmatprep.subr.mxu0 0.0
    %204 = vmatpush1.msra.mxu0 %v48
    %205 = vmatprep.subr.mxu0 0.0
    %206 = vmatpush1.msra.mxu0 %v49
    %207 = vmatprep.subr.mxu0 0.0
    %208 = vmatpush1.msra.mxu0 %v50
    %209 = vmatprep.subr.mxu0 0.0
    %210 = vmatpush1.msra.mxu0 %v51
    %211 = vmatprep.subr.mxu0 0.0
    %212 = vmatpush1.msra.mxu0 %v52
    %213 = vmatprep.subr.mxu0 0.0
    %214 = vmatpush1.msra.mxu0 %v53
    %215 = vmatprep.subr.mxu0 0.0
    %216 = vmatpush1.msra.mxu0 %v54
    %217 = vmatprep.subr.mxu0 0.0
    %218 = vmatpush1.msra.mxu0 %v55
    %219 = vmatprep.subr.mxu0 0.0
    %220 = vmatpush1.msra.mxu0 %v56
    %221 = vmatprep.subr.mxu0 0.0
    %222 = vmatpush1.msra.mxu0 %v57
    %223 = vmatprep.subr.mxu0 0.0
    %224 = vmatpush1.msra.mxu0 0.0
    %225 = vmatprep.subr.mxu0 0.0
    %226 = vmatpush1.msra.mxu0 0.0
    %227 = vmatprep.subr.mxu0 0.0
    %228 = vmatpush1.msra.mxu0 0.0
    %229 = vmatprep.subr.mxu0 0.0
    %230 = vmatpush1.msra.mxu0 0.0
    %231 = vmatprep.subr.mxu0 0.0
    %232 = vmatpush1.msra.mxu0 0.0
    %233 = vmatprep.subr.mxu0 0.0
    %234 = vmatpush1.msra.mxu0 0.0
    %235 = vmatprep.subr.mxu0 0.0
    %236 = vmatpush1.msra.mxu0 0.0
    %237 = vmatprep.subr.mxu0 0.0
    %238 = vmatpush1.msra.mxu0 0.0
    %239 = vmatprep.subr.mxu0 0.0
    %240 = vmatpush1.msra.mxu0 0.0
    %241 = vmatprep.subr.mxu0 0.0
    %242 = vmatpush1.msra.mxu0 0.0
    %243 = vmatprep.subr.mxu0 0.0
    %244 = vmatpush1.msra.mxu0 0.0
    %245 = vmatprep.subr.mxu0 0.0
    %246 = vmatpush1.msra.mxu0 0.0
    %247 = vmatprep.subr.mxu0 0.0
    %248 = vmatpush1.msra.mxu0 0.0
    %249 = vmatprep.subr.mxu0 0.0
    %250 = vmatpush1.msra.mxu0 0.0
    %251 = vmatprep.subr.mxu0 0.0
    %252 = vmatpush1.msra.mxu0 0.0
    %253 = vmatprep.subr.mxu0 0.0
    %254 = vmatpush1.msra.mxu0 0.0
    %255 = vmatprep.mubr.f32.mxu0 0.0
    %256 = vmatmul.mubr.f32.gmra.mrb[0].mxu0 %v190
    %v257 = vpop.f32.mrb[0].mxu0
    %v258 = vadd.f32 0.0, %v257
    %v259 = vpop.f32.mrb[0].mxu0
    %260 = vdwg.mxu0
    %v261 = vrot.slane %v258, 4
    %v262 = vadd.f32 %v258, %v261
    %v263 = vrot.slane %v262, 2
    %v264 = vadd.f32 %v262, %v263
    %v265 = vrot.slane %v264, 1
    %v266 = vadd.f32 %v264, %v265
    %v267 = vmul.f32 %v266, %v161
    %v268 = vsub.f32 %v258, %v267
    %v269 = vmul.f32 %v268, %v268
    %v270 = vrot.slane %v269, 4
    %v271 = vadd.f32 %v269, %v270
    %v272 = vrot.slane %v271, 2
    %v273 = vadd.f32 %v271, %v272
    %v274 = vrot.slane %v273, 1
    %v275 = vadd.f32 %v273, %v274
    %v276 = vmul.f32 %v275, %v161
    %v277 = vadd.f32 %v276, 1e-05
    %v278 = vrsqrt.pop %v277
    %v279 = vmul.f32 %v74, %v278
    %v280 = vmul.f32 %v267, %v279
    %v282 = vrot.slane %v280, 7
    %v284 = vsub.f32 %v74, %v282
    %v285 = vlaneseq
    %v286 = vshrl.u32 %v285, 7
    %v287 = vsub.s32 2, %v286
    %v288 = vrot.slane %v279, %v287
    %v289 = vmul.f32 %v258, %v288
    %v290 = vlaneseq
    %v291 = vshrl.u32 %v290, 7
    %v292 = vsub.s32 3, %v291
    %v293 = vrot.slane %v284, %v292
    %v294 = vadd.f32 %v289, %v293
    %v295 = vmax.f32 %v294, 0.0
    %v296 = vlaneseq
    %v297 = vshrl.u32 %v296, 7
    %v298 = vsub.s32 4, %v297
    %v299 = vrot.slane %v74, %v298
    %300 = vmatprep.subr.mxu0 0.0
    %301 = vmatpush1.msra.mxu0 %v58
    %302 = vmatprep.subr.mxu0 0.0
    %303 = vmatpush1.msra.mxu0 %v59
    %304 = vmatprep.subr.mxu0 0.0
    %305 = vmatpush1.msra.mxu0 %v60
    %306 = vmatprep.subr.mxu0 0.0
    %307 = vmatpush1.msra.mxu0 %v61
    %308 = vmatprep.subr.mxu0 0.0
    %309 = vmatpush1.msra.mxu0 %v62
    %310 = vmatprep.subr.mxu0 0.0
    %311 = vmatpush1.msra.mxu0 %v63
    %312 = vmatprep.subr.mxu0 0.0
    %313 = vmatpush1.msra.mxu0 %v64
    %314 = vmatprep.subr.mxu0 0.0
    %315 = vmatpush1.msra.mxu0 %v65
    %316 = vmatprep.subr.mxu0 0.0
    %317 = vmatpush1.msra.mxu0 %v66
    %318 = vmatprep.subr.mxu0 0.0
    %319 = vmatpush1.msra.mxu0 %v67
    %320 = vmatprep.subr.mxu0 0.0
    %321 = vmatpush1.msra.mxu0 %v68
    %322 = vmatprep.subr.mxu0 0.0
    %323 = vmatpush1.msra.mxu0 %v69
    %324 = vmatprep.subr.mxu0 0.0
    %325 = vmatpush1.msra.mxu0 %v70
    %326 = vmatprep.subr.mxu0 0.0
    %327 = vmatpush1.msra.mxu0 %v71
    %328 = vmatprep.subr.mxu0 0.0
    %329 = vmatpush1.msra.mxu0 %v72
    %330 = vmatprep.subr.mxu0 0.0
    %331 = vmatpush1.msra.mxu0 %v73
    %332 = vmatprep.subr.mxu0 0.0
    %333 = vmatpush1.msra.mxu0 0.0
    %334 = vmatprep.subr.mxu0 0.0
    %335 = vmatpush1.msra.mxu0 0.0
    %336 = vmatprep.subr.mxu0 0.0
    %337 = vmatpush1.msra.mxu0 0.0
    %338 = vmatprep.subr.mxu0 0.0
    %339 = vmatpush1.msra.mxu0 0.0
    %340 = vmatprep.subr.mxu0 0.0
    %341 = vmatpush1.msra.mxu0 0.0
    %342 = vmatprep.subr.mxu0 0.0
    %343 = vmatpush1.msra.mxu0 0.0
    %344 = vmatprep.subr.mxu0 0.0
    %345 = vmatpush1.msra.mxu0 0.0
    %346 = vmatprep.subr.mxu0 0.0
    %347 = vmatpush1.msra.mxu0 0.0
    %348 = vmatprep.subr.mxu0 0.0
    %349 = vmatpush1.msra.mxu0 0.0
    %350 = vmatprep.subr.mxu0 0.0
    %351 = vmatpush1.msra.mxu0 0.0
    %352 = vmatprep.subr.mxu0 0.0
    %353 = vmatpush1.msra.mxu0 0.0
    %354 = vmatprep.subr.mxu0 0.0
    %355 = vmatpush1.msra.mxu0 0.0
    %356 = vmatprep.subr.mxu0 0.0
    %357 = vmatpush1.msra.mxu0 0.0
    %358 = vmatprep.subr.mxu0 0.0
    %359 = vmatpush1.msra.mxu0 0.0
    %360 = vmatprep.subr.mxu0 0.0
    %361 = vmatpush1.msra.mxu0 0.0
    %362 = vmatprep.subr.mxu0 0.0
    %363 = vmatpush1.msra.mxu0 0.0
    %364 = vmatprep.mubr.f32.mxu0 0.0
    %365 = vmatmul.mubr.f32.gmra.mrb[0].mxu0 %v295
    %v366 = vpop.f32.mrb[0].mxu0
    %v367 = vadd.f32 %v299, %v366
    %v368 = vpop.f32.mrb[0].mxu0
    %369 = vdwg.mxu0
    %370 = vst [vmem:[#allocation5] sm:$0xff] %v367
    // Predicated region
    $region14: #{generator_forward.1} parent=1 // pred_check
      _
    $region15: #{generator_forward.1} parent=1 // pred_check_branch
      %372 = sbr.rel (0) target = $region17
    $region16: #{generator_forward.1} parent=1 // pred_region
      %s374 = ssub.s32 128, 128
      %375 = vsyncadd [#allocation4], %s374
      %s377 = sshll.u32 [#allocation5], 4
      %s378 = int_to_ptr.vmem [resolvable:$true] %s377
      %380 = dma.vmem_to_hbm [thread:$0]  %s378, 128, %s2, [#allocation4]
    $region17: #{generator_forward.1} parent=1 // pred_fallthru
      _
    // Predicated region
    $region18: #{generator_forward.1} parent=1 // pred_check
      _
    $region19: #{generator_forward.1} parent=1 // pred_check_branch
      %382 = sbr.rel (0) target = $region21
    $region20: #{generator_forward.1} parent=1 // pred_region
      %383 = dma.done [#allocation4], 128
    $region21: #{generator_forward.1} parent=1 // pred_fallthru
      _
    %384 = vsyncpa [#allocation3], 1
    %385 = vsyncpa [#allocation4], 1

</llo_original>
